<compile_context>
chip_gen: v6e
topology: v6e:2x2x1
jax: 0.10.0
libtpu: 0.0.40
codegen_flags: <defaults>
</compile_context>

<pallas_src>
import jax
import jax.numpy as jnp
from jax.experimental import pallas as pl
from jax.experimental.pallas import tpu as pltpu


# ---- tiling policy (f32) ---------------------------------------------------
_TILE_M = 512                 # grown before N: W is re-streamed M_tiles times
_TILE_N = 512
_TILE_K = 512                 # K tile when the reduction must be split
_MAX_SINGLE_BLOCK_K = 2048    # collapse the K grid axis at or below this K
_VMEM_LIMIT = 48 * 1024 * 1024  # safe on v5e/v6e (128 MiB) and v7x (64 MiB/TC)


def _round_up(v, m):
    return ((v + m - 1) // m) * m


# ---- kernels ----------------------------------------------------------------
def _linear_kernel_fused_k(x_ref, w_ref, b_ref, o_ref):
    """K fits one VMEM block: single MXU contraction, bias fused, direct store."""
    o_ref[...] = (
        jnp.dot(x_ref[...], w_ref[...], preferred_element_type=jnp.float32)
        + b_ref[...]
    ).astype(o_ref.dtype)


def _linear_kernel_ksplit_f32(x_ref, w_ref, b_ref, o_ref):
    """K split across the grid; f32 output block is resident across K, so
    accumulate directly into it (no scratch, no finalize copy)."""
    k = pl.program_id(2)

    @pl.when(k == 0)
    def _():
        o_ref[...] = jnp.zeros_like(o_ref)

    o_ref[...] += jnp.dot(x_ref[...], w_ref[...],
                          preferred_element_type=jnp.float32)

    @pl.when(k == pl.num_programs(2) - 1)
    def _():
        o_ref[...] += b_ref[...]


def _linear_kernel_ksplit_acc(x_ref, w_ref, b_ref, o_ref, acc_ref):
    """K split, narrow output dtype: f32 VMEM scratch accumulator."""
    k = pl.program_id(2)

    @pl.when(k == 0)
    def _():
        acc_ref[...] = jnp.zeros_like(acc_ref)

    acc_ref[...] += jnp.dot(x_ref[...], w_ref[...],
                            preferred_element_type=jnp.float32)

    @pl.when(k == pl.num_programs(2) - 1)
    def _():
        o_ref[...] = (acc_ref[...] + b_ref[...]).astype(o_ref.dtype)


# ---- one-time parameter preparation (call at model load, not per forward) ---
def prepare_linear_params(weight, bias, *, dtype=None):
    """Lay out nn.Linear parameters for the Pallas kernel, once.

    weight: (output_size, input_size)  PyTorch layout
    bias:   (output_size,)
    Returns:
      w_kn  : (k_pad, n_pad) = weight.T zero-padded; contraction dim first.
      b_row : (1, n_pad)     zero-padded bias row.
    `dtype=jnp.bfloat16` optionally halves weight HBM traffic on v6e/v7x
    (accumulation in the kernel stays f32); default keeps f32 precision.
    """
    output_size, input_size = weight.shape

    if input_size <= _MAX_SINGLE_BLOCK_K:
        k_pad = input_size                      # single K block -> no K padding
    else:
        k_pad = _round_up(input_size, _TILE_K)

    if output_size <= _TILE_N:
        n_pad = _round_up(output_size, 128)     # lane-dense output tile
    else:
        n_pad = _round_up(output_size, _TILE_N)

    w_kn = jnp.zeros((k_pad, n_pad), dtype=weight.dtype)
    w_kn = w_kn.at[:input_size, :output_size].set(weight.T)
    b_row = jnp.zeros((1, n_pad), dtype=bias.dtype)
    b_row = b_row.at[0, :output_size].set(bias)

    if dtype is not None:
        w_kn = w_kn.astype(dtype)
        b_row = b_row.astype(dtype)
    return w_kn, b_row


# ---- forward ----------------------------------------------------------------
def shared_network_forward(x, w_kn, b_row, output_size):
    """y = x @ W^T + b with pre-prepared (K, N) weight (PyTorch nn.Linear)."""
    batch, input_size = x.shape
    k_pad, n_pad = w_kn.shape
    assert k_pad >= input_size, "prepared weight smaller than input_size"
    out_dtype = x.dtype

    # --- tiles, derived from the prepared layout ---------------------------
    m_pad = _round_up(batch, 8)
    if m_pad <= _TILE_M:
        tm = m_pad
    else:
        tm = _TILE_M
        m_pad = _round_up(m_pad, tm)
    tn = n_pad if n_pad <= _TILE_N else _TILE_N
    split_k = k_pad > _MAX_SINGLE_BLOCK_K
    tk = _TILE_K if split_k else k_pad

    # --- pad the (small) activation only if needed; weight is pre-padded ---
    if (m_pad, k_pad) != (batch, input_size):
        x_p = jnp.pad(x, ((0, m_pad - batch), (0, k_pad - input_size)))
    else:
        x_p = x

    cost = pl.CostEstimate(
        flops=2 * m_pad * n_pad * k_pad,
        transcendentals=0,
        bytes_accessed=(x_p.size * x_p.dtype.itemsize
                        + w_kn.size * w_kn.dtype.itemsize
                        + b_row.size * b_row.dtype.itemsize
                        + m_pad * n_pad * jnp.dtype(out_dtype).itemsize),
    )

    if not split_k:
        # Single-block K: 2-D parallel grid, no reduction axis at all.
        grid = (m_pad // tm, n_pad // tn)
        out = pl.pallas_call(
            _linear_kernel_fused_k,
            out_shape=jax.ShapeDtypeStruct((m_pad, n_pad), out_dtype),
            grid_spec=pltpu.PrefetchScalarGridSpec(
                num_scalar_prefetch=0,
                grid=grid,
                in_specs=[
                    pl.BlockSpec((tm, tk), lambda i, j: (i, 0)),   # x (M, K)
                    pl.BlockSpec((tk, tn), lambda i, j: (0, j)),   # W^T (K, N)
                    pl.BlockSpec((1, tn), lambda i, j: (0, j)),    # bias row
                ],
                out_specs=pl.BlockSpec((tm, tn), lambda i, j: (i, j)),
            ),
            compiler_params=pltpu.CompilerParams(
                dimension_semantics=("parallel", "parallel"),
                vmem_limit_bytes=_VMEM_LIMIT,
            ),
            cost_estimate=cost,
        )(x_p, w_kn, b_row)
    else:
        grid = (m_pad // tm, n_pad // tn, k_pad // tk)
        use_direct = out_dtype == jnp.float32
        kernel = _linear_kernel_ksplit_f32 if use_direct else _linear_kernel_ksplit_acc
        scratch = [] if use_direct else [pltpu.VMEM((tm, tn), jnp.float32)]
        out = pl.pallas_call(
            kernel,
            out_shape=jax.ShapeDtypeStruct((m_pad, n_pad), out_dtype),
            grid_spec=pltpu.PrefetchScalarGridSpec(
                num_scalar_prefetch=0,
                grid=grid,
                in_specs=[
                    pl.BlockSpec((tm, tk), lambda i, j, k: (i, k)),   # x
                    pl.BlockSpec((tk, tn), lambda i, j, k: (k, j)),   # W^T
                    pl.BlockSpec((1, tn), lambda i, j, k: (0, j)),    # bias
                ],
                out_specs=pl.BlockSpec((tm, tn), lambda i, j, k: (i, j)),
                scratch_shapes=scratch,
            ),
            compiler_params=pltpu.CompilerParams(
                dimension_semantics=("parallel", "parallel", "arbitrary"),
                vmem_limit_bytes=_VMEM_LIMIT,
            ),
            cost_estimate=cost,
        )(x_p, w_kn, b_row)

    if (m_pad, n_pad) != (batch, output_size):
        out = out[:batch, :output_size]
    return out


if __name__ == "__main__":
    # Small shapes consistent with the module's forward.
    batch = 8
    input_size = 32
    output_size = 16

    key = jax.random.PRNGKey(0)
    kx, kw, kb = jax.random.split(key, 3)

    x = jax.random.normal(kx, (batch, input_size), dtype=jnp.float32)
    # PyTorch-like init shapes: W (out, in), b (out,)
    bound = 1.0 / (input_size ** 0.5)
    weight = jax.random.uniform(
        kw, (output_size, input_size), minval=-bound, maxval=bound,
        dtype=jnp.float32)
    bias = jax.random.uniform(
        kb, (output_size,), minval=-bound, maxval=bound, dtype=jnp.float32)

    # One-time parameter layout (transpose + pad); amortized across all calls.
    w_kn, b_row = prepare_linear_params(weight, bias)

    y = shared_network_forward(x, w_kn, b_row, output_size)
    y = jax.block_until_ready(y)

    # Reference check in plain JAX (same math as torch nn.Linear).
    y_ref = x @ weight.T + bias
    assert y.shape == (batch, output_size)
    assert jnp.allclose(y, y_ref, atol=1e-5, rtol=1e-5)

    print("KERNEL_OK")
</pallas_src>

<mosaic_0001>
module attributes {stable_mosaic.version = 11 : i64} {
  func.func @_linear_kernel_fused_k(%arg0: i32, %arg1: i32, %arg2: memref<8x32xf32, #tpu.memory_space<vmem>>, %arg3: memref<32x128xf32, #tpu.memory_space<vmem>>, %arg4: memref<1x128xf32, #tpu.memory_space<vmem>>, %arg5: memref<8x128xf32, #tpu.memory_space<vmem>>) attributes {dimension_semantics = [#tpu.dimension_semantics<parallel>, #tpu.dimension_semantics<parallel>], iteration_bounds = array<i64: 1, 1>, scalar_prefetch = 0 : i64, scratch_operands = 0 : i64, tpu.core_type = #tpu.core_type<tc>, window_params = [{transform_indices = @transform_0, window_bounds = array<i64: 8, 32>}, {transform_indices = @transform_1, window_bounds = array<i64: 32, 128>}, {transform_indices = @transform_2, window_bounds = array<i64: 1, 128>}, {transform_indices = @transform_3, window_bounds = array<i64: 8, 128>}]} {
    %c0 = arith.constant 0 : index
    %c0_0 = arith.constant 0 : index
    %0 = vector.load %arg2[%c0, %c0_0] : memref<8x32xf32, #tpu.memory_space<vmem>>, vector<8x32xf32>
    %c0_1 = arith.constant 0 : index
    %c0_2 = arith.constant 0 : index
    %1 = vector.load %arg3[%c0_1, %c0_2] : memref<32x128xf32, #tpu.memory_space<vmem>>, vector<32x128xf32>
    %cst = arith.constant dense<0.000000e+00> : vector<8x128xf32>
    %2 = tpu.matmul %0, %1, %cst {dimension_numbers = #tpu.dot_dimension_numbers<[1], [0], [0], [1], [0, 0, 1, 1], [], []>} : vector<8x32xf32>, vector<32x128xf32>, vector<8x128xf32> -> vector<8x128xf32>
    %c0_3 = arith.constant 0 : index
    %c0_4 = arith.constant 0 : index
    %3 = vector.load %arg4[%c0_3, %c0_4] : memref<1x128xf32, #tpu.memory_space<vmem>>, vector<1x128xf32>
    %4 = vector.broadcast %3 : vector<1x128xf32> to vector<8x128xf32>
    %5 = arith.addf %2, %4 : vector<8x128xf32>
    %c0_5 = arith.constant 0 : index
    %c0_6 = arith.constant 0 : index
    %6 = vector.load %arg5[%c0_5, %c0_6] : memref<8x128xf32, #tpu.memory_space<vmem>>, vector<8x128xf32>
    tpu.vector_store %arg5[%c0_5, %c0_6], %5 {strides = array<i32>} : memref<8x128xf32, #tpu.memory_space<vmem>>, vector<8x128xf32>,
    return
  }
  func.func @transform_0(%arg0: i32, %arg1: i32) -> (i32, i32) {
    %c0_i32 = arith.constant 0 : i32
    %c0_i32_0 = arith.constant 0 : i32
    return %arg0, %c0_i32 : i32, i32
  }
  func.func @transform_1(%arg0: i32, %arg1: i32) -> (i32, i32) {
    %c0_i32 = arith.constant 0 : i32
    %c0_i32_0 = arith.constant 0 : i32
    return %c0_i32, %arg1 : i32, i32
  }
  func.func @transform_2(%arg0: i32, %arg1: i32) -> (i32, i32) {
    %c0_i32 = arith.constant 0 : i32
    %c0_i32_0 = arith.constant 0 : i32
    return %c0_i32, %arg1 : i32, i32
  }
  func.func @transform_3(%arg0: i32, %arg1: i32) -> (i32, i32) {
    %c0_i32 = arith.constant 0 : i32
    return %arg0, %arg1 : i32, i32
  }
}

</mosaic_0001>

<llo_original>
// kernel: tpu_custom_call.1
$region0: #{tpu_custom_call.1}
  #allocation0 [shape = 'u32[]', space=smem, size = 0x4, offset = 0x4, fixed_abs, tag = 'smem constant byte address 0x4 - core index']
  #allocation1 [shape = 'u32[144,128]{1,0:T(1,128)}', space=vmem, size = 0x12000, scoped, tag = 'internal scratch']
  %s0 = inlined_call_operand.hbm [shape: f32[8,32], index: 0, kind: input, shape index: {}]
  %s1 = inlined_call_operand.hbm [shape: f32[32,128], index: 1, kind: input, shape index: {}]
  %s2 = inlined_call_operand.vmem [shape: f32[1,128], index: 2, kind: input, shape index: {}]
  %s3 = inlined_call_operand.hbm [shape: f32[8,128], index: 3, kind: output, shape index: {}]
  %s4 = sld [smem:[#allocation0]]
  $region30: #{tpu_custom_call.1} parent=0
    _
  %s6 = ssub.s32 1, %s4
  %s7 = scalar_select 0, %s6, %s4
  $region1: #{tpu_custom_call.1} parent=0
    #allocation2 [shape = 'u8[4096]{0}', space=vmem, size = 0x1000, scoped, tag = 'input window, operand 0, single buffered']
    #allocation3 [shape = 's32[1]{0}', space=sflag, size = 0x4, scoped, tag = 'scoped memory for tpu_custom_call.1']
    #allocation4 [shape = 's32[1]{0}', space=sflag, size = 0x4, scoped, tag = 'scoped memory for tpu_custom_call.1']
    #allocation5 [shape = 'u8[16384]{0}', space=vmem, size = 0x4000, scoped, tag = 'input window, operand 1, single buffered']
    #allocation6 [shape = 's32[1]{0}', space=sflag, size = 0x4, scoped, tag = 'scoped memory for tpu_custom_call.1']
    #allocation7 [shape = 'u8[4096]{0}', space=vmem, size = 0x1000, scoped, tag = 'output window, operand 0, single buffered']
    %8 = vsyncpa [#allocation3], 0
    %9 = vsyncpa [#allocation6], 0
    %10 = vsyncpa [#allocation4], 0
    // Predicated region
    $region2: #{tpu_custom_call.1} parent=1 // pred_check
      _
    $region3: #{tpu_custom_call.1} parent=1 // pred_check_branch
      %12 = sbr.rel (0) target = $region5
    $region4: #{tpu_custom_call.1} parent=1 // pred_region
      %s14 = ssub.s32 128, 128
      %15 = vsyncadd [#allocation3], %s14
      %s17 = sshll.u32 [#allocation2], 4
      %s18 = int_to_ptr.vmem [resolvable:$true] %s17
      %20 = dma.hbm_to_vmem [thread:$0]  %s0, 128, %s18, [#allocation3]
    $region5: #{tpu_custom_call.1} parent=1 // pred_fallthru
      _
    // Predicated region
    $region6: #{tpu_custom_call.1} parent=1 // pred_check
      _
    $region7: #{tpu_custom_call.1} parent=1 // pred_check_branch
      %22 = sbr.rel (0) target = $region9
    $region8: #{tpu_custom_call.1} parent=1 // pred_region
      %s24 = ssub.s32 512, 512
      %25 = vsyncadd [#allocation6], %s24
      %s26 = sshll.u32 [#allocation5], 4
      %s27 = int_to_ptr.vmem [resolvable:$true] %s26
      %32 = dma.hbm_to_vmem [thread:$0]  %s1, 512, %s27, [#allocation6], 128, 128, 8
    $region9: #{tpu_custom_call.1} parent=1 // pred_fallthru
      _
    // Predicated region
    $region10: #{tpu_custom_call.1} parent=1 // pred_check
      _
    $region11: #{tpu_custom_call.1} parent=1 // pred_check_branch
      %34 = sbr.rel (0) target = $region13
    $region12: #{tpu_custom_call.1} parent=1 // pred_region
      _
    $region13: #{tpu_custom_call.1} parent=1 // pred_fallthru
      _
    // Predicated region
    $region14: #{tpu_custom_call.1} parent=1 // pred_check
      _
    $region15: #{tpu_custom_call.1} parent=1 // pred_check_branch
      %36 = sbr.rel (0) target = $region17
    $region16: #{tpu_custom_call.1} parent=1 // pred_region
      %37 = dma.done [#allocation3], 128
    $region17: #{tpu_custom_call.1} parent=1 // pred_fallthru
      _
    // Predicated region
    $region18: #{tpu_custom_call.1} parent=1 // pred_check
      _
    $region19: #{tpu_custom_call.1} parent=1 // pred_check_branch
      %39 = sbr.rel (0) target = $region21
    $region20: #{tpu_custom_call.1} parent=1 // pred_region
      %40 = dma.done [#allocation6], 512
    $region21: #{tpu_custom_call.1} parent=1 // pred_fallthru
      _
    %v41 = vld [vmem:[#allocation2] sm:$0xff]
    %v42 = vld [vmem:[#allocation5] sm:$0xff]
    %v43 = vld [vmem:[#allocation5 + $0x8] sm:$0xff]
    %v44 = vld [vmem:[#allocation5 + $0x10] sm:$0xff]
    %v45 = vld [vmem:[#allocation5 + $0x18] sm:$0xff]
    %v46 = vld [vmem:[%s2] sm:$0x1]
    %v48 = vlaneseq
    %v49 = vshrl.u32 %v48, 7
    %v50 = vsub.s32 0, %v49
    %v51 = vrot.slane %v46, %v50
    %vm53 = vcmask 261120
    %v55 = vsel %vm53, %v41, 0
    %57 = vmatprep.subr.mxu0 0.0
    %58 = vmatpush1.msra.mxu0 0.0
    %59 = vmatprep.subr.mxu0 0.0
    %60 = vmatpush1.msra.mxu0 0.0
    %61 = vmatprep.subr.mxu0 0.0
    %62 = vmatpush1.msra.mxu0 0.0
    %63 = vmatprep.subr.mxu0 0.0
    %64 = vmatpush1.msra.mxu0 0.0
    %65 = vmatprep.subr.mxu0 0.0
    %66 = vmatpush1.msra.mxu0 0.0
    %67 = vmatprep.subr.mxu0 0.0
    %68 = vmatpush1.msra.mxu0 0.0
    %69 = vmatprep.subr.mxu0 0.0
    %70 = vmatpush1.msra.mxu0 0.0
    %71 = vmatprep.subr.mxu0 0.0
    %72 = vmatpush1.msra.mxu0 0.0
    %73 = vmatprep.subr.mxu0 0.0
    %74 = vmatpush1.msra.mxu0 0.0
    %75 = vmatprep.subr.mxu0 0.0
    %76 = vmatpush1.msra.mxu0 0.0
    %77 = vmatprep.subr.mxu0 0.0
    %78 = vmatpush1.msra.mxu0 0.0
    %79 = vmatprep.subr.mxu0 0.0
    %80 = vmatpush1.msra.mxu0 0.0
    %81 = vmatprep.subr.mxu0 0.0
    %82 = vmatpush1.msra.mxu0 %v45
    %83 = vmatprep.subr.mxu0 0.0
    %84 = vmatpush1.msra.mxu0 %v44
    %85 = vmatprep.subr.mxu0 0.0
    %86 = vmatpush1.msra.mxu0 %v43
    %87 = vmatprep.subr.mxu0 0.0
    %88 = vmatpush1.msra.mxu0 %v42
    %89 = vmatprep.subr.mxu0 0.0
    %90 = vmatpush2.msra.mxu0 0.0
    %91 = vmatprep.subr.mxu0 0.0
    %92 = vmatpush2.msra.mxu0 0.0
    %93 = vmatprep.subr.mxu0 0.0
    %94 = vmatpush2.msra.mxu0 0.0
    %95 = vmatprep.subr.mxu0 0.0
    %96 = vmatpush2.msra.mxu0 0.0
    %97 = vmatprep.subr.mxu0 0.0
    %98 = vmatpush2.msra.mxu0 0.0
    %99 = vmatprep.subr.mxu0 0.0
    %100 = vmatpush2.msra.mxu0 0.0
    %101 = vmatprep.subr.mxu0 0.0
    %102 = vmatpush2.msra.mxu0 0.0
    %103 = vmatprep.subr.mxu0 0.0
    %104 = vmatpush2.msra.mxu0 0.0
    %105 = vmatprep.subr.mxu0 0.0
    %106 = vmatpush2.msra.mxu0 0.0
    %107 = vmatprep.subr.mxu0 0.0
    %108 = vmatpush2.msra.mxu0 0.0
    %109 = vmatprep.subr.mxu0 0.0
    %110 = vmatpush2.msra.mxu0 0.0
    %111 = vmatprep.subr.mxu0 0.0
    %112 = vmatpush2.msra.mxu0 0.0
    %113 = vmatprep.subr.mxu0 0.0
    %114 = vmatpush2.msra.mxu0 0.0
    %115 = vmatprep.subr.mxu0 0.0
    %116 = vmatpush2.msra.mxu0 0.0
    %117 = vmatprep.subr.mxu0 0.0
    %118 = vmatpush2.msra.mxu0 0.0
    %119 = vmatprep.subr.mxu0 0.0
    %120 = vmatpush2.msra.mxu0 0.0
    %121 = vmatprep.mubr.f32.mxu0 0.0
    %122 = vmatmul.mubr.f32.gmra.mxu0 %v55
    %v123 = vpop.f32.mrf.mxu0
    %v124 = vadd.f32 %v51, %v123
    %v125 = vpop.f32.mrf.mxu0
    %126 = vdwg.mxu0
    %127 = vst [vmem:[#allocation7] sm:$0xff] %v124
    // Predicated region
    $region22: #{tpu_custom_call.1} parent=1 // pred_check
      _
    $region23: #{tpu_custom_call.1} parent=1 // pred_check_branch
      %129 = sbr.rel (0) target = $region25
    $region24: #{tpu_custom_call.1} parent=1 // pred_region
      %s131 = ssub.s32 128, 128
      %132 = vsyncadd [#allocation4], %s131
      %s134 = sshll.u32 [#allocation7], 4
      %s135 = int_to_ptr.vmem [resolvable:$true] %s134
      %137 = dma.vmem_to_hbm [thread:$0]  %s135, 128, %s3, [#allocation4]
    $region25: #{tpu_custom_call.1} parent=1 // pred_fallthru
      _
    // Predicated region
    $region26: #{tpu_custom_call.1} parent=1 // pred_check
      _
    $region27: #{tpu_custom_call.1} parent=1 // pred_check_branch
      %139 = sbr.rel (0) target = $region29
    $region28: #{tpu_custom_call.1} parent=1 // pred_region
      %140 = dma.done [#allocation4], 128
    $region29: #{tpu_custom_call.1} parent=1 // pred_fallthru
      _
    %141 = vsyncpa [#allocation3], 1
    %142 = vsyncpa [#allocation6], 1
    %143 = vsyncpa [#allocation4], 1

</llo_original>
